<compile_context>
chip_gen: v6e
topology: v6e:2x2x1
jax: 0.10.0
libtpu: 0.0.40
codegen_flags: <defaults>
</compile_context>

<pallas_src>
import functools

import numpy as np
import jax
import jax.numpy as jnp
from jax.experimental import pallas as pl
from jax.experimental.pallas import tpu as pltpu


# ------------------------------ model dims ---------------------------------

OBS_SIZE = 16      # observation_size
C_OUT = 4          # conv output channels
K_SIZE = 4         # conv kernel
STRIDE = 2
PAD = 1
L_OUT = (OBS_SIZE + 2 * PAD - K_SIZE) // STRIDE + 1   # = 8
FEAT = C_OUT * L_OUT                                   # = 32
LATENT = 8
HIDDEN = 32

LANE = 128         # TPU lane width; hidden/weight lane dims padded to this
SUBLANE = 8
TILE_M = 1024      # batch tile (rows per grid step); tiny VMEM footprint


def _round_up(x, m):
    return ((x + m - 1) // m) * m


# ---------------------------- Pallas kernel ---------------------------------

def _fused_mlp_kernel(x_ref, w1_ref, b1_ref, w2_ref, b2_ref, o_ref, *,
                      apply_symexp):
    """o = maybe_symexp( relu(x @ W1 + b1) @ W2 + b2 )[:, :n_out] in one shot.

    Matmuls run bf16 x bf16 -> f32 on the MXU at full 128-lane width; the
    result is narrowed to n_out columns *before* the epilogue and the store.
    """
    n_out = o_ref.shape[-1]

    x = x_ref[...].astype(jnp.bfloat16)
    h = jnp.dot(x, w1_ref[...], preferred_element_type=jnp.float32)
    h = jnp.maximum(h + b1_ref[...], 0.0)

    y = jnp.dot(h.astype(jnp.bfloat16), w2_ref[...],
                preferred_element_type=jnp.float32)
    y = y[:, :n_out] + b2_ref[...]          # epilogue only on real columns

    if apply_symexp:
        # symexp(x) = sign(x) * (exp(|x|) - 1).  Small-|x| series branch for
        # expm1-level accuracy; exp lands on the otherwise-idle EUP slot.
        a = jnp.abs(y)
        em1 = jnp.where(a < 1e-4, a + 0.5 * a * a, jnp.exp(a) - 1.0)
        y = jnp.sign(y) * em1

    o_ref[...] = y.astype(o_ref.dtype)


def fused_mlp(x, w1, b1, w2, b2, *, apply_symexp, n_out, tile_m=TILE_M):
    """Batch-tiled fused 2-layer MLP.

    x: (M, K) f32; w1: (K, 128) bf16; b1: (1, 128) f32;
    w2: (128, 128) bf16; b2: (1, n_out) f32.  Output: (M, n_out) f32.
    """
    M, K = x.shape
    Kw, H = w1.shape
    H2, N2 = w2.shape

    # Pick a batch tile: multiple of 8 sublanes; for large M split in (at
    # least) two grid steps so v7x's two TensorCores both get work.
    if M > 512:
        tm = _round_up(-(-M // 2), SUBLANE)
    else:
        tm = max(SUBLANE, _round_up(M, SUBLANE))
    tm = min(tm, tile_m)

    kern = functools.partial(_fused_mlp_kernel, apply_symexp=apply_symexp)
    return pl.pallas_call(
        kern,
        out_shape=jax.ShapeDtypeStruct((M, n_out), jnp.float32),
        grid=(pl.cdiv(M, tm),),
        in_specs=[
            pl.BlockSpec((tm, K), lambda i: (i, 0)),     # batch-tiled input
            pl.BlockSpec((Kw, H), lambda i: (0, 0)),     # resident weights
            pl.BlockSpec((1, H), lambda i: (0, 0)),
            pl.BlockSpec((H2, N2), lambda i: (0, 0)),
            pl.BlockSpec((1, n_out), lambda i: (0, 0)),
        ],
        out_specs=pl.BlockSpec((tm, n_out), lambda i: (i, 0)),
        compiler_params=pltpu.CompilerParams(
            dimension_semantics=("parallel",),
            vmem_limit_bytes=32 * 1024 * 1024,
        ),
    )(x, w1, b1, w2, b2)


# --------------------------- parameter plumbing -----------------------------

def init_params(key):
    ks = jax.random.split(key, 8)

    def glorot(k, shape):
        fan_in, fan_out = shape[0], shape[-1]
        scale = jnp.sqrt(2.0 / (fan_in + fan_out))
        return jax.random.normal(k, shape, jnp.float32) * scale

    return {
        # Conv1d(1, C_OUT, K_SIZE) weight stored PyTorch-style (C_out, 1, K)
        "conv_w": glorot(ks[0], (C_OUT, 1, K_SIZE)),
        "conv_b": jax.random.normal(ks[1], (C_OUT,), jnp.float32) * 0.01,
        # encoder fc: (FEAT, LATENT)
        "enc_w": glorot(ks[2], (FEAT, LATENT)),
        "enc_b": jax.random.normal(ks[3], (LATENT,), jnp.float32) * 0.01,
        # decoder fc1: (LATENT, HIDDEN), fc2: (HIDDEN, OBS_SIZE)
        "dec_w1": glorot(ks[4], (LATENT, HIDDEN)),
        "dec_b1": jax.random.normal(ks[5], (HIDDEN,), jnp.float32) * 0.01,
        "dec_w2": glorot(ks[6], (HIDDEN, OBS_SIZE)),
        "dec_b2": jax.random.normal(ks[7], (OBS_SIZE,), jnp.float32) * 0.01,
    }


def _conv1d_to_dense(conv_w):
    """Fold Conv1d(1, C_OUT, K, stride, pad) into a dense (OBS_SIZE, FEAT)
    matrix whose column order matches PyTorch's NCL flatten (c*L_OUT + l)."""
    w = np.asarray(jax.device_get(conv_w))           # (C_OUT, 1, K)
    dense = np.zeros((OBS_SIZE, FEAT), np.float32)
    for c in range(C_OUT):
        for l in range(L_OUT):
            for k in range(K_SIZE):
                i = l * STRIDE + k - PAD
                if 0 <= i < OBS_SIZE:
                    dense[i, c * L_OUT + l] = w[c, 0, k]
    return jnp.asarray(dense)


def _pad_to(a, shape):
    return jnp.pad(a, [(0, s - d) for d, s in zip(a.shape, shape)])


@functools.partial(jax.jit, static_argnames=("apply_symexp", "n_out"))
def _cae_apply(x, w1, b1, w2, b2, *, apply_symexp, n_out):
    batch_shape = x.shape[:-1]
    m = int(np.prod(batch_shape)) if batch_shape else 1
    x2 = x.reshape(m, x.shape[-1])
    y = fused_mlp(x2, w1, b1, w2, b2, apply_symexp=apply_symexp, n_out=n_out)
    return y.reshape(*batch_shape, n_out)


# ------------------------------ CAEWrapper ---------------------------------

class CAEWrapper:
    """JAX/Pallas equivalent of the PyTorch CAEWrapper forward pass."""

    def __init__(self, params, mode):
        if mode not in ("encode", "decode"):
            raise RuntimeError(f"Mode must be either encode or decode. Got {mode}.")
        self.mode = mode
        if mode == "encode":
            conv_dense = _conv1d_to_dense(params["conv_w"])      # (16, 32)
            conv_bias = jnp.repeat(params["conv_b"], L_OUT)      # (32,) channel-major
            w1 = _pad_to(conv_dense, (OBS_SIZE, LANE)).astype(jnp.bfloat16)
            b1 = _pad_to(conv_bias, (LANE,)).reshape(1, LANE)
            w2 = _pad_to(params["enc_w"], (LANE, LANE)).astype(jnp.bfloat16)
            b2 = params["enc_b"].reshape(1, LATENT)              # (1, n_out) f32
            self.n_out = LATENT
        else:  # decode
            w1 = _pad_to(params["dec_w1"], (LATENT, LANE)).astype(jnp.bfloat16)
            b1 = _pad_to(params["dec_b1"], (LANE,)).reshape(1, LANE)
            w2 = _pad_to(params["dec_w2"], (LANE, LANE)).astype(jnp.bfloat16)
            b2 = params["dec_b2"].reshape(1, OBS_SIZE)           # (1, n_out) f32
            self.n_out = OBS_SIZE
        self.fused_params = (w1, b1, w2, b2)

    def __call__(self, x):
        return _cae_apply(
            x, *self.fused_params,
            apply_symexp=(self.mode == "decode"),
            n_out=self.n_out,
        )


# --------------------------------- main ------------------------------------

if __name__ == "__main__":
    key = jax.random.PRNGKey(0)
    k_param, k_x, k_z = jax.random.split(key, 3)
    params = init_params(k_param)

    enc = CAEWrapper(params, "encode")
    dec = CAEWrapper(params, "decode")

    # encode path: batch dims (2, 4), observation_size = 16
    x = jax.random.normal(k_x, (2, 4, OBS_SIZE), jnp.float32)
    z = jax.block_until_ready(enc(x))
    assert z.shape == (2, 4, LATENT), z.shape

    # decode path: batch dims (2, 4), latent = 8
    zl = jax.random.normal(k_z, (2, 4, LATENT), jnp.float32)
    y = jax.block_until_ready(dec(zl))
    assert y.shape == (2, 4, OBS_SIZE), y.shape

    # ------------- host (numpy) reference check -------------
    p = {k: np.asarray(jax.device_get(v)) for k, v in params.items()}
    xn = np.asarray(jax.device_get(x)).reshape(-1, OBS_SIZE)
    zn = np.asarray(jax.device_get(zl)).reshape(-1, LATENT)

    def ref_encode(xn):
        xp = np.pad(xn, ((0, 0), (PAD, PAD)))
        conv = np.zeros((xn.shape[0], C_OUT, L_OUT), np.float32)
        for c in range(C_OUT):
            for l in range(L_OUT):
                seg = xp[:, l * STRIDE: l * STRIDE + K_SIZE]
                conv[:, c, l] = seg @ p["conv_w"][c, 0] + p["conv_b"][c]
        conv = np.maximum(conv, 0.0)
        feat = conv.reshape(xn.shape[0], FEAT)            # PyTorch NCL flatten
        return feat @ p["enc_w"] + p["enc_b"]

    def ref_decode(zn):
        h = np.maximum(zn @ p["dec_w1"] + p["dec_b1"], 0.0)
        yy = h @ p["dec_w2"] + p["dec_b2"]
        return np.sign(yy) * np.expm1(np.abs(yy))

    np.testing.assert_allclose(
        np.asarray(jax.device_get(z)).reshape(-1, LATENT), ref_encode(xn),
        rtol=5e-2, atol=5e-2)
    np.testing.assert_allclose(
        np.asarray(jax.device_get(y)).reshape(-1, OBS_SIZE), ref_decode(zn),
        rtol=5e-2, atol=5e-2)

    print("KERNEL_OK")
</pallas_src>

<mosaic_0001>
module attributes {stable_mosaic.version = 11 : i64} {
  func.func @_fused_mlp_kernel(%arg0: i32, %arg1: memref<8x16xf32, #tpu.memory_space<vmem>>, %arg2: memref<16x128xbf16, #tpu.memory_space<vmem>>, %arg3: memref<1x128xf32, #tpu.memory_space<vmem>>, %arg4: memref<128x128xbf16, #tpu.memory_space<vmem>>, %arg5: memref<1x8xf32, #tpu.memory_space<vmem>>, %arg6: memref<8x8xf32, #tpu.memory_space<vmem>>) attributes {dimension_semantics = [#tpu.dimension_semantics<parallel>], iteration_bounds = array<i64: 1>, scalar_prefetch = 0 : i64, scratch_operands = 0 : i64, tpu.core_type = #tpu.core_type<tc>, window_params = [{transform_indices = @transform_0, window_bounds = array<i64: 8, 16>}, {pipeline_mode = #tpu.pipeline_mode<synchronous>, transform_indices = @transform_1, window_bounds = array<i64: 16, 128>}, {pipeline_mode = #tpu.pipeline_mode<synchronous>, transform_indices = @transform_2, window_bounds = array<i64: 1, 128>}, {pipeline_mode = #tpu.pipeline_mode<synchronous>, transform_indices = @transform_3, window_bounds = array<i64: 128, 128>}, {pipeline_mode = #tpu.pipeline_mode<synchronous>, transform_indices = @transform_4, window_bounds = array<i64: 1, 8>}, {transform_indices = @transform_5, window_bounds = array<i64: 8, 8>}]} {
    %c0 = arith.constant 0 : index
    %c0_0 = arith.constant 0 : index
    %0 = vector.load %arg1[%c0, %c0_0] : memref<8x16xf32, #tpu.memory_space<vmem>>, vector<8x16xf32>
    %1 = arith.truncf %0 : vector<8x16xf32> to vector<8x16xbf16>
    %c0_1 = arith.constant 0 : index
    %c0_2 = arith.constant 0 : index
    %2 = vector.load %arg2[%c0_1, %c0_2] : memref<16x128xbf16, #tpu.memory_space<vmem>>, vector<16x128xbf16>
    %cst = arith.constant dense<0.000000e+00> : vector<8x128xf32>
    %3 = tpu.matmul %1, %2, %cst {dimension_numbers = #tpu.dot_dimension_numbers<[1], [0], [0], [1], [0, 0, 1, 1], [], []>} : vector<8x16xbf16>, vector<16x128xbf16>, vector<8x128xf32> -> vector<8x128xf32>
    %c0_3 = arith.constant 0 : index
    %c0_4 = arith.constant 0 : index
    %4 = vector.load %arg3[%c0_3, %c0_4] : memref<1x128xf32, #tpu.memory_space<vmem>>, vector<1x128xf32>
    %5 = vector.broadcast %4 : vector<1x128xf32> to vector<8x128xf32>
    %6 = arith.addf %3, %5 : vector<8x128xf32>
    %cst_5 = arith.constant 0.000000e+00 : f32
    %7 = vector.broadcast %cst_5 : f32 to vector<8x128xf32>
    %8 = arith.maximumf %6, %7 : vector<8x128xf32>
    %9 = arith.truncf %8 : vector<8x128xf32> to vector<8x128xbf16>
    %c0_6 = arith.constant 0 : index
    %c0_7 = arith.constant 0 : index
    %10 = vector.load %arg4[%c0_6, %c0_7] : memref<128x128xbf16, #tpu.memory_space<vmem>>, vector<128x128xbf16>
    %cst_8 = arith.constant dense<0.000000e+00> : vector<8x128xf32>
    %11 = tpu.matmul %9, %10, %cst_8 {dimension_numbers = #tpu.dot_dimension_numbers<[1], [0], [0], [1], [0, 0, 1, 1], [], []>} : vector<8x128xbf16>, vector<128x128xbf16>, vector<8x128xf32> -> vector<8x128xf32>
    %12 = vector.extract_strided_slice %11 {offsets = [0, 0], sizes = [8, 8], strides = [1, 1]} : vector<8x128xf32> to vector<8x8xf32>
    %c0_9 = arith.constant 0 : index
    %c0_10 = arith.constant 0 : index
    %13 = vector.load %arg5[%c0_9, %c0_10] : memref<1x8xf32, #tpu.memory_space<vmem>>, vector<1x8xf32>
    %14 = vector.broadcast %13 : vector<1x8xf32> to vector<8x8xf32>
    %15 = arith.addf %12, %14 : vector<8x8xf32>
    %c0_11 = arith.constant 0 : index
    %c0_12 = arith.constant 0 : index
    %16 = vector.load %arg6[%c0_11, %c0_12] : memref<8x8xf32, #tpu.memory_space<vmem>>, vector<8x8xf32>
    tpu.vector_store %arg6[%c0_11, %c0_12], %15 {strides = array<i32>} : memref<8x8xf32, #tpu.memory_space<vmem>>, vector<8x8xf32>,
    return
  }
  func.func @transform_0(%arg0: i32) -> (i32, i32) {
    %c0_i32 = arith.constant 0 : i32
    %c0_i32_0 = arith.constant 0 : i32
    return %arg0, %c0_i32 : i32, i32
  }
  func.func @transform_1(%arg0: i32) -> (i32, i32) {
    %c0_i32 = arith.constant 0 : i32
    %c0_i32_0 = arith.constant 0 : i32
    %c0_i32_1 = arith.constant 0 : i32
    return %c0_i32, %c0_i32_0 : i32, i32
  }
  func.func @transform_2(%arg0: i32) -> (i32, i32) {
    %c0_i32 = arith.constant 0 : i32
    %c0_i32_0 = arith.constant 0 : i32
    %c0_i32_1 = arith.constant 0 : i32
    return %c0_i32, %c0_i32_0 : i32, i32
  }
  func.func @transform_3(%arg0: i32) -> (i32, i32) {
    %c0_i32 = arith.constant 0 : i32
    %c0_i32_0 = arith.constant 0 : i32
    %c0_i32_1 = arith.constant 0 : i32
    return %c0_i32, %c0_i32_0 : i32, i32
  }
  func.func @transform_4(%arg0: i32) -> (i32, i32) {
    %c0_i32 = arith.constant 0 : i32
    %c0_i32_0 = arith.constant 0 : i32
    %c0_i32_1 = arith.constant 0 : i32
    return %c0_i32, %c0_i32_0 : i32, i32
  }
  func.func @transform_5(%arg0: i32) -> (i32, i32) {
    %c0_i32 = arith.constant 0 : i32
    %c0_i32_0 = arith.constant 0 : i32
    return %arg0, %c0_i32 : i32, i32
  }
}

</mosaic_0001>

<llo_original>
// kernel: _cae_apply.1
$region0: #{_cae_apply.1}
  #allocation0 [shape = 'u32[]', space=smem, size = 0x4, offset = 0x4, fixed_abs, tag = 'smem constant byte address 0x4 - core index']
  #allocation1 [shape = 'u32[144,128]{1,0:T(1,128)}', space=vmem, size = 0x12000, scoped, tag = 'internal scratch']
  %s0 = inlined_call_operand.hbm [shape: f32[8,16], index: 0, kind: input, shape index: {}]
  %s1 = inlined_call_operand.hbm [shape: bf16[16,128], index: 1, kind: input, shape index: {}]
  %s2 = inlined_call_operand.vmem [shape: f32[1,128], index: 2, kind: input, shape index: {}]
  %s3 = inlined_call_operand.hbm [shape: bf16[128,128], index: 3, kind: input, shape index: {}]
  %s4 = inlined_call_operand.vmem [shape: f32[1,8], index: 4, kind: input, shape index: {}]
  %s5 = inlined_call_operand.hbm [shape: f32[8,8], index: 5, kind: output, shape index: {}]
  %s6 = sld [smem:[#allocation0]]
  $region42: #{_cae_apply.1} parent=0
    _
  %s8 = ssub.s32 1, %s6
  %s9 = scalar_select 0, %s8, %s6
  $region1: #{_cae_apply.1} parent=0
    #allocation2 [shape = 'u8[4096]{0}', space=vmem, size = 0x1000, scoped, tag = 'input window, operand 0, single buffered']
    #allocation3 [shape = 's32[1]{0}', space=sflag, size = 0x4, scoped, tag = 'scoped memory for _cae_apply.1']
    #allocation4 [shape = 's32[1]{0}', space=sflag, size = 0x4, scoped, tag = 'scoped memory for _cae_apply.1']
    #allocation5 [shape = 'u8[4096]{0}', space=vmem, size = 0x1000, scoped, tag = 'input window, operand 1, single buffered']
    #allocation6 [shape = 's32[1]{0}', space=sflag, size = 0x4, scoped, tag = 'scoped memory for _cae_apply.1']
    #allocation7 [shape = 'u8[32768]{0}', space=vmem, size = 0x8000, scoped, tag = 'input window, operand 3, single buffered']
    #allocation8 [shape = 'u8[4096]{0}', space=vmem, size = 0x1000, scoped, tag = 'output window, operand 0, single buffered']
    %10 = vsyncpa [#allocation3], 0
    %11 = vsyncpa [#allocation6], 0
    %12 = vsyncpa [#allocation4], 0
    // Predicated region
    $region2: #{_cae_apply.1} parent=1 // pred_check
      _
    $region3: #{_cae_apply.1} parent=1 // pred_check_branch
      %14 = sbr.rel (0) target = $region5
    $region4: #{_cae_apply.1} parent=1 // pred_region
      %s16 = ssub.s32 128, 128
      %17 = vsyncadd [#allocation3], %s16
      %s19 = sshll.u32 [#allocation2], 4
      %s20 = int_to_ptr.vmem [resolvable:$true] %s19
      %22 = dma.hbm_to_vmem [thread:$0]  %s0, 128, %s20, [#allocation3]
    $region5: #{_cae_apply.1} parent=1 // pred_fallthru
      _
    // Predicated region
    $region6: #{_cae_apply.1} parent=1 // pred_check
      _
    $region7: #{_cae_apply.1} parent=1 // pred_check_branch
      %24 = sbr.rel (0) target = $region9
    $region8: #{_cae_apply.1} parent=1 // pred_region
      %s26 = ssub.s32 128, 128
      %27 = vsyncadd [#allocation6], %s26
      %s28 = sshll.u32 [#allocation5], 4
      %s29 = int_to_ptr.vmem [resolvable:$true] %s28
      %34 = dma.hbm_to_vmem [thread:$0]  %s1, 128, %s29, [#allocation6], 64, 64, 4
    $region9: #{_cae_apply.1} parent=1 // pred_fallthru
      _
    // Predicated region
    $region10: #{_cae_apply.1} parent=1 // pred_check
      _
    $region11: #{_cae_apply.1} parent=1 // pred_check_branch
      %36 = sbr.rel (0) target = $region13
    $region12: #{_cae_apply.1} parent=1 // pred_region
      _
    $region13: #{_cae_apply.1} parent=1 // pred_fallthru
      _
    // Predicated region
    $region14: #{_cae_apply.1} parent=1 // pred_check
      _
    $region15: #{_cae_apply.1} parent=1 // pred_check_branch
      %38 = sbr.rel (0) target = $region17
    $region16: #{_cae_apply.1} parent=1 // pred_region
      %s40 = ssub.s32 1024, 1024
      %41 = vsyncadd [#allocation6], %s40
      %s42 = sshll.u32 [#allocation7], 4
      %s43 = int_to_ptr.vmem [resolvable:$true] %s42
      %48 = dma.hbm_to_vmem [thread:$0]  %s3, 1024, %s43, [#allocation6], 64, 64, 4
    $region17: #{_cae_apply.1} parent=1 // pred_fallthru
      _
    // Predicated region
    $region18: #{_cae_apply.1} parent=1 // pred_check
      _
    $region19: #{_cae_apply.1} parent=1 // pred_check_branch
      %50 = sbr.rel (0) target = $region21
    $region20: #{_cae_apply.1} parent=1 // pred_region
      _
    $region21: #{_cae_apply.1} parent=1 // pred_fallthru
      _
    // Predicated region
    $region22: #{_cae_apply.1} parent=1 // pred_check
      _
    $region23: #{_cae_apply.1} parent=1 // pred_check_branch
      %52 = sbr.rel (0) target = $region25
    $region24: #{_cae_apply.1} parent=1 // pred_region
      %53 = dma.done [#allocation3], 128
    $region25: #{_cae_apply.1} parent=1 // pred_fallthru
      _
    // Predicated region
    $region26: #{_cae_apply.1} parent=1 // pred_check
      _
    $region27: #{_cae_apply.1} parent=1 // pred_check_branch
      %55 = sbr.rel (0) target = $region29
    $region28: #{_cae_apply.1} parent=1 // pred_region
      %56 = dma.done [#allocation6], 128
    $region29: #{_cae_apply.1} parent=1 // pred_fallthru
      _
    // Predicated region
    $region30: #{_cae_apply.1} parent=1 // pred_check
      _
    $region31: #{_cae_apply.1} parent=1 // pred_check_branch
      %58 = sbr.rel (0) target = $region33
    $region32: #{_cae_apply.1} parent=1 // pred_region
      %59 = dma.done [#allocation6], 1024
    $region33: #{_cae_apply.1} parent=1 // pred_fallthru
      _
    %v61 = vld [vmem:[#allocation2] sm:$0xff]
    %v62 = vpack.c.bf16 %v61, %v61
    %v63 = vld [vmem:[#allocation5] sm:$0xf]
    %v64 = vld [vmem:[#allocation5 + $0x4] sm:$0xf]
    %v65 = vld [vmem:[%s2] sm:$0x1]
    %v67 = vlaneseq
    %v68 = vshrl.u32 %v67, 7
    %v69 = vsub.s32 0, %v68
    %v70 = vrot.slane %v65, %v69
    %v74 = vunpack.c.l.b16 %v63
    %v75 = vunpack.c.l.b16 %v64
    %v76 = vpack.c.b16 %v75, %v74
    %vm78 = vcmask 130048
    %v80 = vsel %vm78, %v62, 0
    %82 = vmatprep.subr.bf16.mxu0 0
    %83 = vmatpush1.bf16.msra.mxu0 0
    %84 = vmatprep.subr.bf16.mxu0 0
    %85 = vmatpush1.bf16.msra.mxu0 0
    %86 = vmatprep.subr.bf16.mxu0 0
    %87 = vmatpush1.bf16.msra.mxu0 0
    %88 = vmatprep.subr.bf16.mxu0 0
    %89 = vmatpush1.bf16.msra.mxu0 0
    %90 = vmatprep.subr.bf16.mxu0 0
    %91 = vmatpush1.bf16.msra.mxu0 0
    %92 = vmatprep.subr.bf16.mxu0 0
    %93 = vmatpush1.bf16.msra.mxu0 0
    %94 = vmatprep.subr.bf16.mxu0 0
    %95 = vmatpush1.bf16.msra.mxu0 0
    %96 = vmatprep.subr.bf16.mxu0 0
    %97 = vmatpush1.bf16.msra.mxu0 %v76
    %98 = vmatprep.subr.bf16.mxu0 0
    %99 = vmatpush2.bf16.msra.mxu0 0
    %100 = vmatprep.subr.bf16.mxu0 0
    %101 = vmatpush2.bf16.msra.mxu0 0
    %102 = vmatprep.subr.bf16.mxu0 0
    %103 = vmatpush2.bf16.msra.mxu0 0
    %104 = vmatprep.subr.bf16.mxu0 0
    %105 = vmatpush2.bf16.msra.mxu0 0
    %106 = vmatprep.subr.bf16.mxu0 0
    %107 = vmatpush2.bf16.msra.mxu0 0
    %108 = vmatprep.subr.bf16.mxu0 0
    %109 = vmatpush2.bf16.msra.mxu0 0
    %110 = vmatprep.subr.bf16.mxu0 0
    %111 = vmatpush2.bf16.msra.mxu0 0
    %112 = vmatprep.subr.bf16.mxu0 0
    %113 = vmatpush2.bf16.msra.mxu0 0
    %114 = vmatprep.mubr.bf16.mxu0 0
    %115 = vmatmul.mubr.bf16.gmra.mxu0 %v80
    %v116 = vpop.f32.mrf.mxu0
    %v117 = vadd.f32 %v70, %v116
    %v118 = vpop.f32.mrf.mxu0
    %v119 = vpop.f32.mrf.mxu0
    %v120 = vpop.f32.mrf.mxu0
    %121 = vdwg.mxu0
    %v122 = vmax.f32 %v117, 0.0
    %v123 = vpack.c.bf16 %v122, %v122
    %v124 = vld [vmem:[#allocation7] sm:$0xf]
    %v125 = vld [vmem:[#allocation7 + $0x4] sm:$0xf]
    %v126 = vld [vmem:[#allocation7 + $0x8] sm:$0xf]
    %v127 = vld [vmem:[#allocation7 + $0xc] sm:$0xf]
    %v128 = vld [vmem:[#allocation7 + $0x10] sm:$0xf]
    %v129 = vld [vmem:[#allocation7 + $0x14] sm:$0xf]
    %v130 = vld [vmem:[#allocation7 + $0x18] sm:$0xf]
    %v131 = vld [vmem:[#allocation7 + $0x1c] sm:$0xf]
    %v132 = vld [vmem:[#allocation7 + $0x20] sm:$0xf]
    %v133 = vld [vmem:[#allocation7 + $0x24] sm:$0xf]
    %v134 = vld [vmem:[#allocation7 + $0x28] sm:$0xf]
    %v135 = vld [vmem:[#allocation7 + $0x2c] sm:$0xf]
    %v136 = vld [vmem:[#allocation7 + $0x30] sm:$0xf]
    %v137 = vld [vmem:[#allocation7 + $0x34] sm:$0xf]
    %v138 = vld [vmem:[#allocation7 + $0x38] sm:$0xf]
    %v139 = vld [vmem:[#allocation7 + $0x3c] sm:$0xf]
    %v156 = vunpack.c.l.b16 %v124
    %v157 = vunpack.c.l.b16 %v125
    %v158 = vunpack.c.l.b16 %v126
    %v159 = vunpack.c.l.b16 %v127
    %v160 = vunpack.c.l.b16 %v128
    %v161 = vunpack.c.l.b16 %v129
    %v162 = vunpack.c.l.b16 %v130
    %v163 = vunpack.c.l.b16 %v131
    %v164 = vunpack.c.l.b16 %v132
    %v165 = vunpack.c.l.b16 %v133
    %v166 = vunpack.c.l.b16 %v134
    %v167 = vunpack.c.l.b16 %v135
    %v168 = vunpack.c.l.b16 %v136
    %v169 = vunpack.c.l.b16 %v137
    %v170 = vunpack.c.l.b16 %v138
    %v171 = vunpack.c.l.b16 %v139
    %v172 = vpack.c.b16 %v157, %v156
    %v173 = vpack.c.b16 %v159, %v158
    %v174 = vpack.c.b16 %v161, %v160
    %v175 = vpack.c.b16 %v163, %v162
    %v176 = vpack.c.b16 %v165, %v164
    %v177 = vpack.c.b16 %v167, %v166
    %v178 = vpack.c.b16 %v169, %v168
    %v179 = vpack.c.b16 %v171, %v170
    %188 = vmatprep.subr.bf16.mxu0 0
    %189 = vmatpush1.bf16.msra.mxu0 %v179
    %190 = vmatprep.subr.bf16.mxu0 0
    %191 = vmatpush1.bf16.msra.mxu0 %v178
    %192 = vmatprep.subr.bf16.mxu0 0
    %193 = vmatpush1.bf16.msra.mxu0 %v177
    %194 = vmatprep.subr.bf16.mxu0 0
    %195 = vmatpush1.bf16.msra.mxu0 %v176
    %196 = vmatprep.subr.bf16.mxu0 0
    %197 = vmatpush1.bf16.msra.mxu0 %v175
    %198 = vmatprep.subr.bf16.mxu0 0
    %199 = vmatpush1.bf16.msra.mxu0 %v174
    %200 = vmatprep.subr.bf16.mxu0 0
    %201 = vmatpush1.bf16.msra.mxu0 %v173
    %202 = vmatprep.subr.bf16.mxu0 0
    %203 = vmatpush1.bf16.msra.mxu0 %v172
    %204 = vmatprep.subr.bf16.mxu0 0
    %205 = vmatpush2.bf16.msra.mxu0 0
    %206 = vmatprep.subr.bf16.mxu0 0
    %207 = vmatpush2.bf16.msra.mxu0 0
    %208 = vmatprep.subr.bf16.mxu0 0
    %209 = vmatpush2.bf16.msra.mxu0 0
    %210 = vmatprep.subr.bf16.mxu0 0
    %211 = vmatpush2.bf16.msra.mxu0 0
    %212 = vmatprep.subr.bf16.mxu0 0
    %213 = vmatpush2.bf16.msra.mxu0 0
    %214 = vmatprep.subr.bf16.mxu0 0
    %215 = vmatpush2.bf16.msra.mxu0 0
    %216 = vmatprep.subr.bf16.mxu0 0
    %217 = vmatpush2.bf16.msra.mxu0 0
    %218 = vmatprep.subr.bf16.mxu0 0
    %219 = vmatpush2.bf16.msra.mxu0 0
    %220 = vmatprep.mubr.bf16.mxu0 0
    %221 = vmatmul.mubr.bf16.gmra.mxu0 %v123
    %v222 = vpop.f32.mrf.mxu0
    %v223 = vadd.f32 0.0, %v222
    %v224 = vpop.f32.mrf.mxu0
    %v225 = vpop.f32.mrf.mxu0
    %v226 = vpop.f32.mrf.mxu0
    %227 = vdwg.mxu0
    %v228 = vld [vmem:[%s4] sm:$0x1]
    %v230 = vlaneseq
    %v231 = vshrl.u32 %v230, 7
    %v232 = vsub.s32 0, %v231
    %v233 = vrot.slane %v228, %v232
    %v235 = vadd.f32 %v223, %v233
    %vm236 = vcmask 64512
    %237 = vst.msk [vmem:[#allocation8] sm:$0xff] %vm236, %v235
    // Predicated region
    $region34: #{_cae_apply.1} parent=1 // pred_check
      _
    $region35: #{_cae_apply.1} parent=1 // pred_check_branch
      %239 = sbr.rel (0) target = $region37
    $region36: #{_cae_apply.1} parent=1 // pred_region
      %s241 = ssub.s32 128, 128
      %242 = vsyncadd [#allocation4], %s241
      %s244 = sshll.u32 [#allocation8], 4
      %s245 = int_to_ptr.vmem [resolvable:$true] %s244
      %247 = dma.vmem_to_hbm [thread:$0]  %s245, 128, %s5, [#allocation4]
    $region37: #{_cae_apply.1} parent=1 // pred_fallthru
      _
    // Predicated region
    $region38: #{_cae_apply.1} parent=1 // pred_check
      _
    $region39: #{_cae_apply.1} parent=1 // pred_check_branch
      %249 = sbr.rel (0) target = $region41
    $region40: #{_cae_apply.1} parent=1 // pred_region
      %250 = dma.done [#allocation4], 128
    $region41: #{_cae_apply.1} parent=1 // pred_fallthru
      _
    %251 = vsyncpa [#allocation3], 1
    %252 = vsyncpa [#allocation6], 1
    %253 = vsyncpa [#allocation4], 1

</llo_original>
